<compile_context>
chip_gen: v7x
topology: tpu7x:2x2x1
jax: 0.10.0
libtpu: 0.0.40
codegen_flags: <defaults>
</compile_context>

<pallas_src>
import jax
import jax.numpy as jnp
from jax.experimental import pallas as pl
from jax.experimental.pallas import tpu as pltpu

_MAX_COLS = 512                 # lane-dense width: multiple of 128 lanes
_TARGET_TILE_BYTES = 4 << 20    # ~4 MiB per tile: pure HBM streaming kernel


def _add_constant_kernel(p_ref, x_ref, o_ref):
    # p_ref: (1, 1) f32 scalar in SMEM; x_ref / o_ref: lane-dense VMEM tiles.
    p = p_ref[0, 0].astype(x_ref.dtype)   # keep the add in x's dtype
    o_ref[...] = x_ref[...] + p


def _launch(x2d, p2d):
    rows, cols = x2d.shape
    itemsize = x2d.dtype.itemsize
    n = rows * cols

    # Sublane packing: 8 rows/vreg for 32-bit, 16 for 16-bit, 32 for 8-bit.
    packing = max(8, 32 // itemsize)
    tile_rows = max(packing, _TARGET_TILE_BYTES // (cols * itemsize))
    if tile_rows >= rows:
        tile_rows = rows                  # block == full dim is always legal
    else:
        tile_rows = max(packing, (tile_rows // packing) * packing)

    grid = (pl.cdiv(rows, tile_rows),)    # partial last block handled by Pallas

    return pl.pallas_call(
        _add_constant_kernel,
        out_shape=jax.ShapeDtypeStruct((rows, cols), x2d.dtype),
        grid_spec=pltpu.PrefetchScalarGridSpec(
            num_scalar_prefetch=0,
            grid=grid,
            in_specs=[
                pl.BlockSpec(memory_space=pltpu.SMEM),               # scalar p
                pl.BlockSpec((tile_rows, cols), lambda i: (i, 0)),   # x tile
            ],
            out_specs=pl.BlockSpec((tile_rows, cols), lambda i: (i, 0)),
        ),
        compiler_params=pltpu.CompilerParams(
            # TODO(synk): on v7x, pltpu.CORE_PARALLEL on this axis would let both
            # TensorCores stream; kept "parallel" for portable compilation.
            dimension_semantics=("parallel",),
            vmem_limit_bytes=40 << 20,    # 4 MiB tiles x (in+out) x double-buffer = 16 MiB
        ),
        cost_estimate=pl.CostEstimate(
            flops=n, transcendentals=0, bytes_accessed=2 * n * itemsize),
    )(p2d, x2d)


@jax.jit
def fool_add_constant(x: jnp.ndarray, p) -> jnp.ndarray:
    """Computes x + p (p is a learned scalar parameter), like FoolAddConstant."""
    orig_shape = x.shape
    n = x.size
    if n == 0:
        return x

    p2d = jnp.asarray(p, dtype=jnp.float32).reshape(1, 1)

    # Widest lane-dense column width (multiple of 128) dividing n: the
    # flatten/reshape is then a free bitcast and no padding is required.
    cols = 0
    for c in (_MAX_COLS, 256, 128):
        if n % c == 0:
            cols = c
            break

    if cols:
        out2d = _launch(x.reshape(n // cols, cols), p2d)
        return out2d.reshape(orig_shape)

    # TODO(synk): misaligned sizes (n % 128 != 0) fall back to a pad + slice
    # path, which costs one extra HBM pass on each side of the kernel.
    cols = 128
    rows = pl.cdiv(n, cols)
    flat = jnp.pad(x.reshape(-1), (0, rows * cols - n))
    out2d = _launch(flat.reshape(rows, cols), p2d)
    return out2d.reshape(-1)[:n].reshape(orig_shape)


if __name__ == "__main__":
    key = jax.random.PRNGKey(0)
    # Small NCHW input consistent with a conv-style module: (N=2, C=4, H=16, W=16)
    x = jax.random.normal(key, (2, 4, 16, 16), dtype=jnp.float32)

    # Deterministic parameter init (module default p=0.1)
    p = jnp.float32(0.1)

    ref = x + p

    out = fool_add_constant(x, p)
    out = jax.block_until_ready(out)

    assert out.shape == x.shape and out.dtype == x.dtype
    assert jnp.allclose(out, ref, atol=1e-6), "mismatch vs reference"

    print("KERNEL_OK")
</pallas_src>

<mosaic_0001>
module attributes {stable_mosaic.version = 11 : i64} {
  func.func @_add_constant_kernel(%arg0: i32, %arg1: memref<1x1xf32, #tpu.memory_space<smem>>, %arg2: memref<4x512xf32, #tpu.memory_space<vmem>>, %arg3: memref<4x512xf32, #tpu.memory_space<vmem>>) attributes {dimension_semantics = [#tpu.dimension_semantics<parallel>], iteration_bounds = array<i64: 1>, scalar_prefetch = 0 : i64, scratch_operands = 0 : i64, tpu.core_type = #tpu.core_type<tc>, window_params = [{transform_indices = @transform_0, window_bounds = array<i64: 1, 1>}, {transform_indices = @transform_1, window_bounds = array<i64: 4, 512>}, {transform_indices = @transform_2, window_bounds = array<i64: 4, 512>}]} {
    %c0 = arith.constant 0 : index
    %c0_0 = arith.constant 0 : index
    %0 = memref.load %arg1[%c0, %c0_0] : memref<1x1xf32, #tpu.memory_space<smem>>
    %c0_1 = arith.constant 0 : index
    %c0_2 = arith.constant 0 : index
    %1 = vector.load %arg2[%c0_1, %c0_2] : memref<4x512xf32, #tpu.memory_space<vmem>>, vector<4x512xf32>
    %2 = vector.broadcast %0 : f32 to vector<4x512xf32>
    %3 = arith.addf %1, %2 : vector<4x512xf32>
    %c0_3 = arith.constant 0 : index
    %c0_4 = arith.constant 0 : index
    %4 = vector.load %arg3[%c0_3, %c0_4] : memref<4x512xf32, #tpu.memory_space<vmem>>, vector<4x512xf32>
    tpu.vector_store %arg3[%c0_3, %c0_4], %3 {strides = array<i32>} : memref<4x512xf32, #tpu.memory_space<vmem>>, vector<4x512xf32>,
    return
  }
  func.func @transform_0(%arg0: i32) -> (i32, i32) {
    %c0_i32 = arith.constant 0 : i32
    %c0_i32_0 = arith.constant 0 : i32
    %c0_i32_1 = arith.constant 0 : i32
    return %c0_i32, %c0_i32_0 : i32, i32
  }
  func.func @transform_1(%arg0: i32) -> (i32, i32) {
    %c0_i32 = arith.constant 0 : i32
    %c0_i32_0 = arith.constant 0 : i32
    return %arg0, %c0_i32 : i32, i32
  }
  func.func @transform_2(%arg0: i32) -> (i32, i32) {
    %c0_i32 = arith.constant 0 : i32
    %c0_i32_0 = arith.constant 0 : i32
    return %arg0, %c0_i32 : i32, i32
  }
}

</mosaic_0001>

<llo_original>
// kernel: fool_add_constant.1
$region0: #{fool_add_constant.1}
  #allocation0 [shape = 'u32[]', space=smem, size = 0x4, offset = 0x4, fixed_abs, tag = 'smem constant byte address 0x4 - core index']
  #allocation1 [shape = 'u32[144,128]{1,0:T(1,128)}', space=vmem, size = 0x12000, scoped, tag = 'internal scratch']
  #allocation2 [shape = 'f32[1,1]{1,0:T(1,128)S(6)}', space=smem, size = 0x200, scoped, tag = 'scoped memory for fool_add_constant.1']
  %s0 = inlined_call_operand.<no memory space> [shape: f32[1,1], index: 0, kind: input, shape index: {}]
  %s1 = inlined_call_operand.vmem [shape: f32[4,512], index: 1, kind: input, shape index: {}]
  %s2 = inlined_call_operand.vmem [shape: f32[4,512], index: 2, kind: output, shape index: {}]
  %s3 = sld [smem:[#allocation0]]
  $region18: #{fool_add_constant.1} parent=0
    _
  %s5 = ssub.s32 1, %s3
  %s6 = scalar_select 0, %s5, %s3
  %7 = sst [smem:[#allocation2]] %s0
  // Predicated region
  $region2: #{fool_add_constant.1} parent=0 // pred_check
    _
  $region3: #{fool_add_constant.1} parent=0 // pred_check_branch
    %9 = sbr.rel (0) target = $region5
  $region4: #{fool_add_constant.1} parent=0 // pred_region
    _
  $region5: #{fool_add_constant.1} parent=0 // pred_fallthru
    _
  // Predicated region
  $region6: #{fool_add_constant.1} parent=0 // pred_check
    _
  $region7: #{fool_add_constant.1} parent=0 // pred_check_branch
    %11 = sbr.rel (0) target = $region9
  $region8: #{fool_add_constant.1} parent=0 // pred_region
    _
  $region9: #{fool_add_constant.1} parent=0 // pred_fallthru
    _
  %s12 = sld [smem:[#allocation2]]
  %v13 = vld [vmem:[%s1] sm:$0xff]
  %v14 = vld [vmem:[%s1 + $0x8] sm:$0xff]
  %v15 = vstv %s12
  %v16 = vadd.f32 %v13, %v15
  %v17 = vadd.f32 %v14, %v15
  %18 = vst [vmem:[%s2] sm:$0xff] %v16
  %19 = vst [vmem:[%s2 + $0x8] sm:$0xff] %v17
  // Predicated region
  $region10: #{fool_add_constant.1} parent=0 // pred_check
    _
  $region11: #{fool_add_constant.1} parent=0 // pred_check_branch
    %21 = sbr.rel (0) target = $region13
  $region12: #{fool_add_constant.1} parent=0 // pred_region
    _
  $region13: #{fool_add_constant.1} parent=0 // pred_fallthru
    _
  // Predicated region
  $region14: #{fool_add_constant.1} parent=0 // pred_check
    _
  $region15: #{fool_add_constant.1} parent=0 // pred_check_branch
    %23 = sbr.rel (0) target = $region17
  $region16: #{fool_add_constant.1} parent=0 // pred_region
    _
  $region17: #{fool_add_constant.1} parent=0 // pred_fallthru
    _

</llo_original>
